<compile_context>
chip_gen: v7x
topology: tpu7x:2x2x1
jax: 0.10.0
libtpu: 0.0.40
codegen_flags: <defaults>
</compile_context>

<pallas_src>
import functools

import jax
import jax.numpy as jnp
from jax.experimental import pallas as pl
from jax.experimental.pallas import tpu as pltpu


def _round_up(x, m):
    return (x + m - 1) // m * m


def _ncf_mlp_kernel(num_layers, *refs):
    # refs layout:
    #   u_ref, i_ref,
    #   w0u_ref, w0i_ref, b0_ref,
    #   (w_ref, b_ref) for layers 1..num_layers-1,
    #   wp_ref (1, F), bp_ref (1, 1),
    #   out_ref (TB, 1)
    u_ref, i_ref, w0u_ref, w0i_ref, b0_ref = refs[:5]
    n_hidden = 2 * (num_layers - 1)
    hidden_refs = refs[5:5 + n_hidden]
    wp_ref = refs[5 + n_hidden]
    bp_ref = refs[6 + n_hidden]
    out_ref = refs[7 + n_hidden]

    # Layer 0 fused with the (virtual) concat:
    #   relu(concat(u, i) @ W0 + b0) == relu(u @ W0u + i @ W0i + b0)
    x = jnp.dot(u_ref[...], w0u_ref[...], preferred_element_type=jnp.float32)
    x = x + jnp.dot(i_ref[...], w0i_ref[...], preferred_element_type=jnp.float32)
    x = jnp.maximum(x + b0_ref[...], 0.0)                    # f32 elementwise path

    # Remaining MLP tower: Linear -> ReLU, halving feature width each layer.
    for li in range(num_layers - 1):
        w = hidden_refs[2 * li][...]                          # (in, out), compute dtype
        b = hidden_refs[2 * li + 1][...]                      # (1, out), f32
        x = jnp.dot(x.astype(w.dtype), w, preferred_element_type=jnp.float32)
        x = jnp.maximum(x + b, 0.0)

    # Predict layer (F -> 1): VPU multiply + lane reduce instead of an N=1 MXU pass.
    logits = jnp.sum(x * wp_ref[...], axis=-1, keepdims=True) + bp_ref[...]
    out_ref[...] = jax.nn.sigmoid(logits)                     # EUP


def ncf_forward(user_idx, item_idx, params, *, num_layers,
                compute_dtype=jnp.bfloat16, block_b=1024):
    """NCF forward pass. Returns (B,) float32 predictions."""
    # --- glue: embedding row-gather in plain JAX (see TODO above) ---
    u_emb = params["embed_user"][user_idx].astype(compute_dtype)   # (B, E)
    i_emb = params["embed_item"][item_idx].astype(compute_dtype)   # (B, E)
    B, E = u_emb.shape

    # --- batch tile: multiple of 8 sublanes, capped by block_b ---
    TB = _round_up(min(block_b, _round_up(B, 8)), 8)
    Bp = _round_up(B, TB)
    if Bp != B:
        pad = Bp - B
        u_emb = jnp.pad(u_emb, ((0, pad), (0, 0)))
        i_emb = jnp.pad(i_emb, ((0, pad), (0, 0)))

    # --- assemble kernel operands (weights pre-transposed to (in, out)) ---
    w0 = params["w0"]                                 # (2E, out0)
    operands = [
        u_emb,
        i_emb,
        w0[:E].astype(compute_dtype),                 # W0_u: (E, out0)
        w0[E:].astype(compute_dtype),                 # W0_i: (E, out0)
        params["b0"].astype(jnp.float32),             # (1, out0)
    ]
    for li in range(1, num_layers):
        operands.append(params[f"w{li}"].astype(compute_dtype))   # (in, out)
        operands.append(params[f"b{li}"].astype(jnp.float32))     # (1, out)
    operands.append(params["wp"].reshape(1, -1).astype(jnp.float32))  # (1, F)
    operands.append(params["bp"].reshape(1, 1).astype(jnp.float32))   # (1, 1)

    # --- BlockSpecs: stream embedding tiles, keep weights VMEM-resident ---
    in_specs = [
        pl.BlockSpec((TB, E), lambda i: (i, 0)),      # u_emb tile
        pl.BlockSpec((TB, E), lambda i: (i, 0)),      # i_emb tile
    ]
    for op in operands[2:]:
        # explicit default arg avoids late-binding of the loop variable
        in_specs.append(
            pl.BlockSpec(op.shape, lambda i, _nd=op.ndim: (0,) * _nd))
    out_spec = pl.BlockSpec((TB, 1), lambda i: (i, 0))

    # --- VMEM budget: double-buffered input tiles + output + resident weights ---
    in_bytes = jnp.dtype(compute_dtype).itemsize
    tile_in_bytes = 2 * 2 * TB * E * in_bytes          # u,i x double buffer
    tile_out_bytes = 2 * TB * 1 * 4
    weight_bytes = sum(int(op.nbytes) for op in operands[2:])
    vmem_limit = int(min(
        64 * 1024 * 1024,
        max(8 * 1024 * 1024,
            2 * (tile_in_bytes + tile_out_bytes + weight_bytes) + (4 << 20))))

    kernel = functools.partial(_ncf_mlp_kernel, num_layers)

    pred = pl.pallas_call(
        kernel,
        out_shape=jax.ShapeDtypeStruct((Bp, 1), jnp.float32),
        grid=(Bp // TB,),
        in_specs=in_specs,
        out_specs=out_spec,
        compiler_params=pltpu.CompilerParams(
            dimension_semantics=("parallel",),        # megacore-shard batch (v7x)
            vmem_limit_bytes=vmem_limit),
    )(*operands)

    return pred[:B, 0]                                # == prediction.view(-1)


def init_params(key, user_num, item_num, factor_num, num_layers):
    """Deterministic synthetic parameter init matching NCF.__init__ shapes."""
    E = factor_num * 2 ** (num_layers - 1)
    keys = jax.random.split(key, 2 + 2 * num_layers + 2)
    params = {
        "embed_user": jax.random.normal(keys[0], (user_num, E), jnp.float32) * 0.1,
        "embed_item": jax.random.normal(keys[1], (item_num, E), jnp.float32) * 0.1,
    }
    k = 2
    for li in range(num_layers):
        in_size = factor_num * 2 ** (num_layers - li)
        out_size = in_size // 2
        # stored as (in, out) = PyTorch weight (out, in) transposed
        params[f"w{li}"] = jax.random.normal(keys[k], (in_size, out_size), jnp.float32) * 0.1
        params[f"b{li}"] = jax.random.normal(keys[k + 1], (1, out_size), jnp.float32) * 0.1
        k += 2
    params["wp"] = jax.random.normal(keys[k], (factor_num, 1), jnp.float32) * 0.1
    params["bp"] = jax.random.normal(keys[k + 1], (1, 1), jnp.float32) * 0.1
    return params


def ncf_reference(user_idx, item_idx, params, *, num_layers):
    """Pure-JAX f32 reference for correctness check."""
    x = jnp.concatenate(
        [params["embed_user"][user_idx], params["embed_item"][item_idx]], axis=-1)
    for li in range(num_layers):
        x = jnp.maximum(x @ params[f"w{li}"] + params[f"b{li}"], 0.0)
    return jax.nn.sigmoid(x @ params["wp"] + params["bp"]).reshape(-1)


if __name__ == "__main__":
    user_num, item_num = 32, 48
    factor_num, num_layers = 16, 2
    batch = 8

    key = jax.random.PRNGKey(0)
    pkey, ukey, ikey = jax.random.split(key, 3)
    params = init_params(pkey, user_num, item_num, factor_num, num_layers)

    user = jax.random.randint(ukey, (batch,), 0, user_num, dtype=jnp.int32)
    item = jax.random.randint(ikey, (batch,), 0, item_num, dtype=jnp.int32)

    ref = ncf_reference(user, item, params, num_layers=num_layers)

    # exact-precision (f32) path: tight tolerance vs reference
    out_f32 = ncf_forward(user, item, params, num_layers=num_layers,
                          compute_dtype=jnp.float32)
    out_f32 = jax.block_until_ready(out_f32)
    assert out_f32.shape == (batch,), out_f32.shape
    assert jnp.allclose(out_f32, ref, atol=1e-5, rtol=1e-5), (out_f32, ref)

    # default bf16-inputs / f32-accumulation path
    out_bf16 = jax.block_until_ready(
        ncf_forward(user, item, params, num_layers=num_layers))
    assert out_bf16.shape == (batch,), out_bf16.shape
    assert jnp.allclose(out_bf16, ref, atol=2e-2, rtol=2e-2), (out_bf16, ref)

    # multi-tile + batch-padding path (grid > 1)
    ukey2, ikey2 = jax.random.split(jax.random.PRNGKey(1))
    user2 = jax.random.randint(ukey2, (300,), 0, user_num, dtype=jnp.int32)
    item2 = jax.random.randint(ikey2, (300,), 0, item_num, dtype=jnp.int32)
    ref2 = ncf_reference(user2, item2, params, num_layers=num_layers)
    out2 = jax.block_until_ready(
        ncf_forward(user2, item2, params, num_layers=num_layers, block_b=64))
    assert out2.shape == (300,), out2.shape
    assert jnp.allclose(out2, ref2, atol=2e-2, rtol=2e-2), (out2, ref2)

    print("KERNEL_OK")
</pallas_src>

<mosaic_0001>
module attributes {stable_mosaic.version = 11 : i64} {
  func.func @_ncf_mlp_kernel(%arg0: i32, %arg1: memref<8x32xf32, #tpu.memory_space<vmem>>, %arg2: memref<8x32xf32, #tpu.memory_space<vmem>>, %arg3: memref<32x32xf32, #tpu.memory_space<vmem>>, %arg4: memref<32x32xf32, #tpu.memory_space<vmem>>, %arg5: memref<1x32xf32, #tpu.memory_space<vmem>>, %arg6: memref<32x16xf32, #tpu.memory_space<vmem>>, %arg7: memref<1x16xf32, #tpu.memory_space<vmem>>, %arg8: memref<1x16xf32, #tpu.memory_space<vmem>>, %arg9: memref<1x1xf32, #tpu.memory_space<vmem>>, %arg10: memref<8x1xf32, #tpu.memory_space<vmem>>) attributes {dimension_semantics = [#tpu.dimension_semantics<parallel>], iteration_bounds = array<i64: 1>, scalar_prefetch = 0 : i64, scratch_operands = 0 : i64, tpu.core_type = #tpu.core_type<tc>, window_params = [{transform_indices = @transform_0, window_bounds = array<i64: 8, 32>}, {transform_indices = @transform_1, window_bounds = array<i64: 8, 32>}, {pipeline_mode = #tpu.pipeline_mode<synchronous>, transform_indices = @transform_2, window_bounds = array<i64: 32, 32>}, {pipeline_mode = #tpu.pipeline_mode<synchronous>, transform_indices = @transform_3, window_bounds = array<i64: 32, 32>}, {pipeline_mode = #tpu.pipeline_mode<synchronous>, transform_indices = @transform_4, window_bounds = array<i64: 1, 32>}, {pipeline_mode = #tpu.pipeline_mode<synchronous>, transform_indices = @transform_5, window_bounds = array<i64: 32, 16>}, {pipeline_mode = #tpu.pipeline_mode<synchronous>, transform_indices = @transform_6, window_bounds = array<i64: 1, 16>}, {pipeline_mode = #tpu.pipeline_mode<synchronous>, transform_indices = @transform_7, window_bounds = array<i64: 1, 16>}, {pipeline_mode = #tpu.pipeline_mode<synchronous>, transform_indices = @transform_8, window_bounds = array<i64: 1, 1>}, {transform_indices = @transform_9, window_bounds = array<i64: 8, 1>}]} {
    %c0 = arith.constant 0 : index
    %c0_0 = arith.constant 0 : index
    %0 = vector.load %arg1[%c0, %c0_0] : memref<8x32xf32, #tpu.memory_space<vmem>>, vector<8x32xf32>
    %c0_1 = arith.constant 0 : index
    %c0_2 = arith.constant 0 : index
    %1 = vector.load %arg3[%c0_1, %c0_2] : memref<32x32xf32, #tpu.memory_space<vmem>>, vector<32x32xf32>
    %cst = arith.constant dense<0.000000e+00> : vector<8x32xf32>
    %2 = tpu.matmul %0, %1, %cst {dimension_numbers = #tpu.dot_dimension_numbers<[1], [0], [0], [1], [0, 0, 1, 1], [], []>} : vector<8x32xf32>, vector<32x32xf32>, vector<8x32xf32> -> vector<8x32xf32>
    %c0_3 = arith.constant 0 : index
    %c0_4 = arith.constant 0 : index
    %3 = vector.load %arg2[%c0_3, %c0_4] : memref<8x32xf32, #tpu.memory_space<vmem>>, vector<8x32xf32>
    %c0_5 = arith.constant 0 : index
    %c0_6 = arith.constant 0 : index
    %4 = vector.load %arg4[%c0_5, %c0_6] : memref<32x32xf32, #tpu.memory_space<vmem>>, vector<32x32xf32>
    %cst_7 = arith.constant dense<0.000000e+00> : vector<8x32xf32>
    %5 = tpu.matmul %3, %4, %cst_7 {dimension_numbers = #tpu.dot_dimension_numbers<[1], [0], [0], [1], [0, 0, 1, 1], [], []>} : vector<8x32xf32>, vector<32x32xf32>, vector<8x32xf32> -> vector<8x32xf32>
    %6 = arith.addf %2, %5 : vector<8x32xf32>
    %c0_8 = arith.constant 0 : index
    %c0_9 = arith.constant 0 : index
    %7 = vector.load %arg5[%c0_8, %c0_9] : memref<1x32xf32, #tpu.memory_space<vmem>>, vector<1x32xf32>
    %8 = vector.broadcast %7 : vector<1x32xf32> to vector<8x32xf32>
    %9 = arith.addf %6, %8 : vector<8x32xf32>
    %cst_10 = arith.constant 0.000000e+00 : f32
    %10 = vector.broadcast %cst_10 : f32 to vector<8x32xf32>
    %11 = arith.maximumf %9, %10 : vector<8x32xf32>
    %c0_11 = arith.constant 0 : index
    %c0_12 = arith.constant 0 : index
    %12 = vector.load %arg6[%c0_11, %c0_12] : memref<32x16xf32, #tpu.memory_space<vmem>>, vector<32x16xf32>
    %c0_13 = arith.constant 0 : index
    %c0_14 = arith.constant 0 : index
    %13 = vector.load %arg7[%c0_13, %c0_14] : memref<1x16xf32, #tpu.memory_space<vmem>>, vector<1x16xf32>
    %cst_15 = arith.constant dense<0.000000e+00> : vector<8x16xf32>
    %14 = tpu.matmul %11, %12, %cst_15 {dimension_numbers = #tpu.dot_dimension_numbers<[1], [0], [0], [1], [0, 0, 1, 1], [], []>} : vector<8x32xf32>, vector<32x16xf32>, vector<8x16xf32> -> vector<8x16xf32>
    %15 = vector.broadcast %13 : vector<1x16xf32> to vector<8x16xf32>
    %16 = arith.addf %14, %15 : vector<8x16xf32>
    %cst_16 = arith.constant 0.000000e+00 : f32
    %17 = vector.broadcast %cst_16 : f32 to vector<8x16xf32>
    %18 = arith.maximumf %16, %17 : vector<8x16xf32>
    %c0_17 = arith.constant 0 : index
    %c0_18 = arith.constant 0 : index
    %19 = vector.load %arg8[%c0_17, %c0_18] : memref<1x16xf32, #tpu.memory_space<vmem>>, vector<1x16xf32>
    %20 = vector.broadcast %19 : vector<1x16xf32> to vector<8x16xf32>
    %21 = arith.mulf %18, %20 : vector<8x16xf32>
    %cst_19 = arith.constant dense<0.000000e+00> : vector<8xf32>
    %22 = vector.multi_reduction <add>, %21, %cst_19 [1] : vector<8x16xf32> to vector<8xf32>
    %23 = vector.shape_cast %22 : vector<8xf32> to vector<8x1xf32>
    %c0_20 = arith.constant 0 : index
    %c0_21 = arith.constant 0 : index
    %24 = vector.load %arg9[%c0_20, %c0_21] : memref<1x1xf32, #tpu.memory_space<vmem>>, vector<1x1xf32>
    %25 = vector.broadcast %24 : vector<1x1xf32> to vector<8x1xf32>
    %26 = arith.addf %23, %25 : vector<8x1xf32>
    %27 = arith.negf %26 : vector<8x1xf32>
    %28 = math.exp %27 : vector<8x1xf32>
    %cst_22 = arith.constant 1.000000e+00 : f32
    %29 = vector.broadcast %cst_22 : f32 to vector<8x1xf32>
    %30 = arith.addf %29, %28 : vector<8x1xf32>
    %31 = arith.divf %29, %30 : vector<8x1xf32>
    %c0_23 = arith.constant 0 : index
    %c0_24 = arith.constant 0 : index
    %32 = vector.load %arg10[%c0_23, %c0_24] : memref<8x1xf32, #tpu.memory_space<vmem>>, vector<8x1xf32>
    tpu.vector_store %arg10[%c0_23, %c0_24], %31 {strides = array<i32>} : memref<8x1xf32, #tpu.memory_space<vmem>>, vector<8x1xf32>,
    return
  }
  func.func @transform_0(%arg0: i32) -> (i32, i32) {
    %c0_i32 = arith.constant 0 : i32
    %c0_i32_0 = arith.constant 0 : i32
    return %arg0, %c0_i32 : i32, i32
  }
  func.func @transform_1(%arg0: i32) -> (i32, i32) {
    %c0_i32 = arith.constant 0 : i32
    %c0_i32_0 = arith.constant 0 : i32
    return %arg0, %c0_i32 : i32, i32
  }
  func.func @transform_2(%arg0: i32) -> (i32, i32) {
    %c0_i32 = arith.constant 0 : i32
    %c0_i32_0 = arith.constant 0 : i32
    %c0_i32_1 = arith.constant 0 : i32
    return %c0_i32, %c0_i32_0 : i32, i32
  }
  func.func @transform_3(%arg0: i32) -> (i32, i32) {
    %c0_i32 = arith.constant 0 : i32
    %c0_i32_0 = arith.constant 0 : i32
    %c0_i32_1 = arith.constant 0 : i32
    return %c0_i32, %c0_i32_0 : i32, i32
  }
  func.func @transform_4(%arg0: i32) -> (i32, i32) {
    %c0_i32 = arith.constant 0 : i32
    %c0_i32_0 = arith.constant 0 : i32
    %c0_i32_1 = arith.constant 0 : i32
    return %c0_i32, %c0_i32_0 : i32, i32
  }
  func.func @transform_5(%arg0: i32) -> (i32, i32) {
    %c0_i32 = arith.constant 0 : i32
    %c0_i32_0 = arith.constant 0 : i32
    %c0_i32_1 = arith.constant 0 : i32
    return %c0_i32, %c0_i32_0 : i32, i32
  }
  func.func @transform_6(%arg0: i32) -> (i32, i32) {
    %c0_i32 = arith.constant 0 : i32
    %c0_i32_0 = arith.constant 0 : i32
    %c0_i32_1 = arith.constant 0 : i32
    return %c0_i32, %c0_i32_0 : i32, i32
  }
  func.func @transform_7(%arg0: i32) -> (i32, i32) {
    %c0_i32 = arith.constant 0 : i32
    %c0_i32_0 = arith.constant 0 : i32
    %c0_i32_1 = arith.constant 0 : i32
    return %c0_i32, %c0_i32_0 : i32, i32
  }
  func.func @transform_8(%arg0: i32) -> (i32, i32) {
    %c0_i32 = arith.constant 0 : i32
    %c0_i32_0 = arith.constant 0 : i32
    %c0_i32_1 = arith.constant 0 : i32
    return %c0_i32, %c0_i32_0 : i32, i32
  }
  func.func @transform_9(%arg0: i32) -> (i32, i32) {
    %c0_i32 = arith.constant 0 : i32
    %c0_i32_0 = arith.constant 0 : i32
    return %arg0, %c0_i32 : i32, i32
  }
}

</mosaic_0001>

<llo_original>
// kernel: tpu_custom_call.1
$region0: #{tpu_custom_call.1}
  #allocation0 [shape = 'u32[]', space=smem, size = 0x4, offset = 0x4, fixed_abs, tag = 'smem constant byte address 0x4 - core index']
  #allocation1 [shape = 'u32[144,128]{1,0:T(1,128)}', space=vmem, size = 0x12000, scoped, tag = 'internal scratch']
  #allocation2 [shape = 'f32[1,1]{1,0:T(1,128)S(1)}', space=vmem, size = 0x200, scoped, tag = 'scoped memory for tpu_custom_call.1']
  %s0 = inlined_call_operand.vmem [shape: f32[8,32], index: 0, kind: input, shape index: {}]
  %s1 = inlined_call_operand.vmem [shape: f32[8,32], index: 1, kind: input, shape index: {}]
  %s2 = inlined_call_operand.vmem [shape: f32[32,32], index: 2, kind: input, shape index: {}]
  %s3 = inlined_call_operand.hbm [shape: f32[32,32], index: 3, kind: input, shape index: {}]
  %s4 = inlined_call_operand.vmem [shape: f32[1,32], index: 4, kind: input, shape index: {}]
  %s5 = inlined_call_operand.vmem [shape: f32[32,16], index: 5, kind: input, shape index: {}]
  %s6 = inlined_call_operand.vmem [shape: f32[1,16], index: 6, kind: input, shape index: {}]
  %s7 = inlined_call_operand.vmem [shape: f32[1,16], index: 7, kind: input, shape index: {}]
  %s8 = inlined_call_operand.<no memory space> [shape: f32[1,1], index: 8, kind: input, shape index: {}]
  %s9 = inlined_call_operand.vmem [shape: f32[8,1], index: 9, kind: output, shape index: {}]
  %s10 = sld [smem:[#allocation0]]
  $region50: #{tpu_custom_call.1} parent=0
    _
  %s12 = ssub.s32 1, %s10
  %s13 = scalar_select 0, %s12, %s10
  %v14 = vstv %s8
  %15 = vst [vmem:[#allocation2] sm:$0x1] %v14
  $region1: #{tpu_custom_call.1} parent=0
    #allocation3 [shape = 'u8[16384]{0}', space=vmem, size = 0x4000, scoped, tag = 'input window, operand 3, single buffered']
    #allocation4 [shape = 's32[1]{0}', space=sflag, size = 0x4, scoped, tag = 'scoped memory for tpu_custom_call.1']
    %16 = vsyncpa [#allocation4], 0
    // Predicated region
    $region2: #{tpu_custom_call.1} parent=1 // pred_check
      _
    $region3: #{tpu_custom_call.1} parent=1 // pred_check_branch
      %18 = sbr.rel (0) target = $region5
    $region4: #{tpu_custom_call.1} parent=1 // pred_region
      _
    $region5: #{tpu_custom_call.1} parent=1 // pred_fallthru
      _
    // Predicated region
    $region6: #{tpu_custom_call.1} parent=1 // pred_check
      _
    $region7: #{tpu_custom_call.1} parent=1 // pred_check_branch
      %20 = sbr.rel (0) target = $region9
    $region8: #{tpu_custom_call.1} parent=1 // pred_region
      _
    $region9: #{tpu_custom_call.1} parent=1 // pred_fallthru
      _
    // Predicated region
    $region10: #{tpu_custom_call.1} parent=1 // pred_check
      _
    $region11: #{tpu_custom_call.1} parent=1 // pred_check_branch
      %22 = sbr.rel (0) target = $region13
    $region12: #{tpu_custom_call.1} parent=1 // pred_region
      _
    $region13: #{tpu_custom_call.1} parent=1 // pred_fallthru
      _
    // Predicated region
    $region14: #{tpu_custom_call.1} parent=1 // pred_check
      _
    $region15: #{tpu_custom_call.1} parent=1 // pred_check_branch
      %24 = sbr.rel (0) target = $region17
    $region16: #{tpu_custom_call.1} parent=1 // pred_region
      %s26 = ssub.s32 512, 512
      %27 = vsyncadd [#allocation4], %s26
      %s28 = sshll.u32 [#allocation3], 4
      %s29 = int_to_ptr.vmem [resolvable:$true] %s28
      %34 = dma.hbm_to_vmem [thread:$0]  %s3, 512, %s29, [#allocation4], 128, 128, 8
    $region17: #{tpu_custom_call.1} parent=1 // pred_fallthru
      _
    // Predicated region
    $region18: #{tpu_custom_call.1} parent=1 // pred_check
      _
    $region19: #{tpu_custom_call.1} parent=1 // pred_check_branch
      %36 = sbr.rel (0) target = $region21
    $region20: #{tpu_custom_call.1} parent=1 // pred_region
      _
    $region21: #{tpu_custom_call.1} parent=1 // pred_fallthru
      _
    // Predicated region
    $region22: #{tpu_custom_call.1} parent=1 // pred_check
      _
    $region23: #{tpu_custom_call.1} parent=1 // pred_check_branch
      %38 = sbr.rel (0) target = $region25
    $region24: #{tpu_custom_call.1} parent=1 // pred_region
      _
    $region25: #{tpu_custom_call.1} parent=1 // pred_fallthru
      _
    // Predicated region
    $region26: #{tpu_custom_call.1} parent=1 // pred_check
      _
    $region27: #{tpu_custom_call.1} parent=1 // pred_check_branch
      %40 = sbr.rel (0) target = $region29
    $region28: #{tpu_custom_call.1} parent=1 // pred_region
      _
    $region29: #{tpu_custom_call.1} parent=1 // pred_fallthru
      _
    // Predicated region
    $region30: #{tpu_custom_call.1} parent=1 // pred_check
      _
    $region31: #{tpu_custom_call.1} parent=1 // pred_check_branch
      %42 = sbr.rel (0) target = $region33
    $region32: #{tpu_custom_call.1} parent=1 // pred_region
      _
    $region33: #{tpu_custom_call.1} parent=1 // pred_fallthru
      _
    // Predicated region
    $region34: #{tpu_custom_call.1} parent=1 // pred_check
      _
    $region35: #{tpu_custom_call.1} parent=1 // pred_check_branch
      %44 = sbr.rel (0) target = $region37
    $region36: #{tpu_custom_call.1} parent=1 // pred_region
      _
    $region37: #{tpu_custom_call.1} parent=1 // pred_fallthru
      _
    // Predicated region
    $region38: #{tpu_custom_call.1} parent=1 // pred_check
      _
    $region39: #{tpu_custom_call.1} parent=1 // pred_check_branch
      %46 = sbr.rel (0) target = $region41
    $region40: #{tpu_custom_call.1} parent=1 // pred_region
      %47 = dma.done [#allocation4], 512
    $region41: #{tpu_custom_call.1} parent=1 // pred_fallthru
      _
    %v48 = vld [vmem:[%s0] sm:$0xff]
    %v49 = vld [vmem:[%s2] sm:$0xff]
    %v50 = vld [vmem:[%s2 + $0x8] sm:$0xff]
    %v51 = vld [vmem:[%s2 + $0x10] sm:$0xff]
    %v52 = vld [vmem:[%s2 + $0x18] sm:$0xff]
    %v53 = vld [vmem:[%s1] sm:$0xff]
    %v54 = vld [vmem:[#allocation3] sm:$0xff]
    %v55 = vld [vmem:[#allocation3 + $0x8] sm:$0xff]
    %v56 = vld [vmem:[#allocation3 + $0x10] sm:$0xff]
    %v57 = vld [vmem:[#allocation3 + $0x18] sm:$0xff]
    %vm58 = vcmask 261120
    %v60 = vsel %vm58, %v53, 0
    %62 = vmatprep.subr.mxu0 0.0
    %63 = vmatpush1.msra.mxu0 %v54
    %64 = vmatprep.subr.mxu0 0.0
    %65 = vmatpush1.msra.mxu0 %v55
    %66 = vmatprep.subr.mxu0 0.0
    %67 = vmatpush1.msra.mxu0 %v56
    %68 = vmatprep.subr.mxu0 0.0
    %69 = vmatpush1.msra.mxu0 %v57
    %70 = vmatprep.subr.mxu0 0.0
    %71 = vmatpush1.msra.mxu0 0.0
    %72 = vmatprep.subr.mxu0 0.0
    %73 = vmatpush1.msra.mxu0 0.0
    %74 = vmatprep.subr.mxu0 0.0
    %75 = vmatpush1.msra.mxu0 0.0
    %76 = vmatprep.subr.mxu0 0.0
    %77 = vmatpush1.msra.mxu0 0.0
    %78 = vmatprep.subr.mxu0 0.0
    %79 = vmatpush1.msra.mxu0 0.0
    %80 = vmatprep.subr.mxu0 0.0
    %81 = vmatpush1.msra.mxu0 0.0
    %82 = vmatprep.subr.mxu0 0.0
    %83 = vmatpush1.msra.mxu0 0.0
    %84 = vmatprep.subr.mxu0 0.0
    %85 = vmatpush1.msra.mxu0 0.0
    %86 = vmatprep.subr.mxu0 0.0
    %87 = vmatpush1.msra.mxu0 0.0
    %88 = vmatprep.subr.mxu0 0.0
    %89 = vmatpush1.msra.mxu0 0.0
    %90 = vmatprep.subr.mxu0 0.0
    %91 = vmatpush1.msra.mxu0 0.0
    %92 = vmatprep.subr.mxu0 0.0
    %93 = vmatpush1.msra.mxu0 0.0
    %94 = vmatprep.subr.mxu0 0.0
    %95 = vmatpush1.msra.mxu0 0.0
    %96 = vmatprep.subr.mxu0 0.0
    %97 = vmatpush1.msra.mxu0 0.0
    %98 = vmatprep.subr.mxu0 0.0
    %99 = vmatpush1.msra.mxu0 0.0
    %100 = vmatprep.subr.mxu0 0.0
    %101 = vmatpush1.msra.mxu0 0.0
    %102 = vmatprep.subr.mxu0 0.0
    %103 = vmatpush1.msra.mxu0 0.0
    %104 = vmatprep.subr.mxu0 0.0
    %105 = vmatpush1.msra.mxu0 0.0
    %106 = vmatprep.subr.mxu0 0.0
    %107 = vmatpush1.msra.mxu0 0.0
    %108 = vmatprep.subr.mxu0 0.0
    %109 = vmatpush1.msra.mxu0 0.0
    %110 = vmatprep.subr.mxu0 0.0
    %111 = vmatpush1.msra.mxu0 0.0
    %112 = vmatprep.subr.mxu0 0.0
    %113 = vmatpush1.msra.mxu0 0.0
    %114 = vmatprep.subr.mxu0 0.0
    %115 = vmatpush1.msra.mxu0 0.0
    %116 = vmatprep.subr.mxu0 0.0
    %117 = vmatpush1.msra.mxu0 0.0
    %118 = vmatprep.subr.mxu0 0.0
    %119 = vmatpush1.msra.mxu0 0.0
    %120 = vmatprep.subr.mxu0 0.0
    %121 = vmatpush1.msra.mxu0 0.0
    %122 = vmatprep.subr.mxu0 0.0
    %123 = vmatpush1.msra.mxu0 0.0
    %124 = vmatprep.subr.mxu0 0.0
    %125 = vmatpush1.msra.mxu0 0.0
    %126 = vmatprep.mubr.f32.mxu0 0.0
    %127 = vmatmul.mubr.f32.gmra.mrb[0].mxu0 %v60
    %v128 = vpop.f32.mrb[0].mxu0
    %v129 = vadd.f32 0.0, %v128
    %v130 = vpop.f32.mrb[0].mxu0
    %131 = vdwg.mxu0
    %v133 = vsel %vm58, %v48, 0
    %135 = vmatprep.subr.mxu0 0.0
    %136 = vmatpush1.msra.mxu0 %v49
    %137 = vmatprep.subr.mxu0 0.0
    %138 = vmatpush1.msra.mxu0 %v50
    %139 = vmatprep.subr.mxu0 0.0
    %140 = vmatpush1.msra.mxu0 %v51
    %141 = vmatprep.subr.mxu0 0.0
    %142 = vmatpush1.msra.mxu0 %v52
    %143 = vmatprep.subr.mxu0 0.0
    %144 = vmatpush1.msra.mxu0 0.0
    %145 = vmatprep.subr.mxu0 0.0
    %146 = vmatpush1.msra.mxu0 0.0
    %147 = vmatprep.subr.mxu0 0.0
    %148 = vmatpush1.msra.mxu0 0.0
    %149 = vmatprep.subr.mxu0 0.0
    %150 = vmatpush1.msra.mxu0 0.0
    %151 = vmatprep.subr.mxu0 0.0
    %152 = vmatpush1.msra.mxu0 0.0
    %153 = vmatprep.subr.mxu0 0.0
    %154 = vmatpush1.msra.mxu0 0.0
    %155 = vmatprep.subr.mxu0 0.0
    %156 = vmatpush1.msra.mxu0 0.0
    %157 = vmatprep.subr.mxu0 0.0
    %158 = vmatpush1.msra.mxu0 0.0
    %159 = vmatprep.subr.mxu0 0.0
    %160 = vmatpush1.msra.mxu0 0.0
    %161 = vmatprep.subr.mxu0 0.0
    %162 = vmatpush1.msra.mxu0 0.0
    %163 = vmatprep.subr.mxu0 0.0
    %164 = vmatpush1.msra.mxu0 0.0
    %165 = vmatprep.subr.mxu0 0.0
    %166 = vmatpush1.msra.mxu0 0.0
    %167 = vmatprep.subr.mxu0 0.0
    %168 = vmatpush1.msra.mxu0 0.0
    %169 = vmatprep.subr.mxu0 0.0
    %170 = vmatpush1.msra.mxu0 0.0
    %171 = vmatprep.subr.mxu0 0.0
    %172 = vmatpush1.msra.mxu0 0.0
    %173 = vmatprep.subr.mxu0 0.0
    %174 = vmatpush1.msra.mxu0 0.0
    %175 = vmatprep.subr.mxu0 0.0
    %176 = vmatpush1.msra.mxu0 0.0
    %177 = vmatprep.subr.mxu0 0.0
    %178 = vmatpush1.msra.mxu0 0.0
    %179 = vmatprep.subr.mxu0 0.0
    %180 = vmatpush1.msra.mxu0 0.0
    %181 = vmatprep.subr.mxu0 0.0
    %182 = vmatpush1.msra.mxu0 0.0
    %183 = vmatprep.subr.mxu0 0.0
    %184 = vmatpush1.msra.mxu0 0.0
    %185 = vmatprep.subr.mxu0 0.0
    %186 = vmatpush1.msra.mxu0 0.0
    %187 = vmatprep.subr.mxu0 0.0
    %188 = vmatpush1.msra.mxu0 0.0
    %189 = vmatprep.subr.mxu0 0.0
    %190 = vmatpush1.msra.mxu0 0.0
    %191 = vmatprep.subr.mxu0 0.0
    %192 = vmatpush1.msra.mxu0 0.0
    %193 = vmatprep.subr.mxu0 0.0
    %194 = vmatpush1.msra.mxu0 0.0
    %195 = vmatprep.subr.mxu0 0.0
    %196 = vmatpush1.msra.mxu0 0.0
    %197 = vmatprep.subr.mxu0 0.0
    %198 = vmatpush1.msra.mxu0 0.0
    %199 = vmatprep.mubr.f32.mxu0 0.0
    %200 = vmatmul.mubr.f32.gmra.mrb[0].mxu0 %v133
    %v201 = vpop.f32.mrb[0].mxu0
    %v202 = vadd.f32 %v129, %v201
    %v203 = vpop.f32.mrb[0].mxu0
    %204 = vdwg.mxu0
    %v205 = vld [vmem:[%s4] sm:$0x1]
    %v207 = vlaneseq
    %v208 = vshrl.u32 %v207, 7
    %v209 = vsub.s32 0, %v208
    %v210 = vrot.slane %v205, %v209
    %v212 = vadd.f32 %v202, %v210
    %v213 = vmax.f32 %v212, 0.0
    %v214 = vld [vmem:[%s5] sm:$0xff]
    %v215 = vld [vmem:[%s5 + $0x8] sm:$0xff]
    %v216 = vld [vmem:[%s5 + $0x10] sm:$0xff]
    %v217 = vld [vmem:[%s5 + $0x18] sm:$0xff]
    %v218 = vld [vmem:[%s6] sm:$0x1]
    %v220 = vlaneseq
    %v221 = vshrl.u32 %v220, 7
    %v222 = vsub.s32 0, %v221
    %v223 = vrot.slane %v218, %v222
    %v226 = vsel %vm58, %v213, 0
    %228 = vmatprep.subr.mxu0 0.0
    %229 = vmatpush1.msra.mxu0 %v214
    %230 = vmatprep.subr.mxu0 0.0
    %231 = vmatpush1.msra.mxu0 %v215
    %232 = vmatprep.subr.mxu0 0.0
    %233 = vmatpush1.msra.mxu0 %v216
    %234 = vmatprep.subr.mxu0 0.0
    %235 = vmatpush1.msra.mxu0 %v217
    %236 = vmatprep.subr.mxu0 0.0
    %237 = vmatpush1.msra.mxu0 0.0
    %238 = vmatprep.subr.mxu0 0.0
    %239 = vmatpush1.msra.mxu0 0.0
    %240 = vmatprep.subr.mxu0 0.0
    %241 = vmatpush1.msra.mxu0 0.0
    %242 = vmatprep.subr.mxu0 0.0
    %243 = vmatpush1.msra.mxu0 0.0
    %244 = vmatprep.subr.mxu0 0.0
    %245 = vmatpush1.msra.mxu0 0.0
    %246 = vmatprep.subr.mxu0 0.0
    %247 = vmatpush1.msra.mxu0 0.0
    %248 = vmatprep.subr.mxu0 0.0
    %249 = vmatpush1.msra.mxu0 0.0
    %250 = vmatprep.subr.mxu0 0.0
    %251 = vmatpush1.msra.mxu0 0.0
    %252 = vmatprep.subr.mxu0 0.0
    %253 = vmatpush1.msra.mxu0 0.0
    %254 = vmatprep.subr.mxu0 0.0
    %255 = vmatpush1.msra.mxu0 0.0
    %256 = vmatprep.subr.mxu0 0.0
    %257 = vmatpush1.msra.mxu0 0.0
    %258 = vmatprep.subr.mxu0 0.0
    %259 = vmatpush1.msra.mxu0 0.0
    %260 = vmatprep.subr.mxu0 0.0
    %261 = vmatpush1.msra.mxu0 0.0
    %262 = vmatprep.subr.mxu0 0.0
    %263 = vmatpush1.msra.mxu0 0.0
    %264 = vmatprep.subr.mxu0 0.0
    %265 = vmatpush1.msra.mxu0 0.0
    %266 = vmatprep.subr.mxu0 0.0
    %267 = vmatpush1.msra.mxu0 0.0
    %268 = vmatprep.subr.mxu0 0.0
    %269 = vmatpush1.msra.mxu0 0.0
    %270 = vmatprep.subr.mxu0 0.0
    %271 = vmatpush1.msra.mxu0 0.0
    %272 = vmatprep.subr.mxu0 0.0
    %273 = vmatpush1.msra.mxu0 0.0
    %274 = vmatprep.subr.mxu0 0.0
    %275 = vmatpush1.msra.mxu0 0.0
    %276 = vmatprep.subr.mxu0 0.0
    %277 = vmatpush1.msra.mxu0 0.0
    %278 = vmatprep.subr.mxu0 0.0
    %279 = vmatpush1.msra.mxu0 0.0
    %280 = vmatprep.subr.mxu0 0.0
    %281 = vmatpush1.msra.mxu0 0.0
    %282 = vmatprep.subr.mxu0 0.0
    %283 = vmatpush1.msra.mxu0 0.0
    %284 = vmatprep.subr.mxu0 0.0
    %285 = vmatpush1.msra.mxu0 0.0
    %286 = vmatprep.subr.mxu0 0.0
    %287 = vmatpush1.msra.mxu0 0.0
    %288 = vmatprep.subr.mxu0 0.0
    %289 = vmatpush1.msra.mxu0 0.0
    %290 = vmatprep.subr.mxu0 0.0
    %291 = vmatpush1.msra.mxu0 0.0
    %292 = vmatprep.mubr.f32.mxu0 0.0
    %293 = vmatmul.mubr.f32.gmra.mrb[0].mxu0 %v226
    %v294 = vpop.f32.mrb[0].mxu0
    %v295 = vadd.f32 %v223, %v294
    %v296 = vpop.f32.mrb[0].mxu0
    %297 = vdwg.mxu0
    %v298 = vmax.f32 %v295, 0.0
    %v299 = vld [vmem:[%s7] sm:$0x1]
    %v301 = vlaneseq
    %v302 = vshrl.u32 %v301, 7
    %v303 = vsub.s32 0, %v302
    %v304 = vrot.slane %v299, %v303
    %v306 = vmul.f32 %v298, %v304
    %vm307 = vcmask 130048
    %v308 = vsel %vm307, %v306, 0.0
    %309 = vadd.xlane.f32.xlu0 %v308
    %v310 = vpop.xlane.xlu0 %309
    %v311 = vld [vmem:[#allocation2] sm:$0x1]
    %v313 = vlaneseq
    %v314 = vshrl.u32 %v313, 7
    %v315 = vsub.s32 0, %v314
    %v316 = vrot.slane %v311, %v315
    %v318 = vadd.f32 %v310, %v316
    %v319 = vxor.u32 %v318, 2147483648
    %v320 = vmul.f32 %v319, 1.442695
    %v321 = vpow.pop %v320
    %v322 = vadd.f32 %v321, 1.0
    %v323 = vrcp.pop %v322
    %v324 = vmul.f32 1.0, %v323
    %vm325 = vcmask 7168
    %326 = vst.msk [vmem:[%s9] sm:$0xff] %vm325, %v324
    // Predicated region
    $region42: #{tpu_custom_call.1} parent=1 // pred_check
      _
    $region43: #{tpu_custom_call.1} parent=1 // pred_check_branch
      %328 = sbr.rel (0) target = $region45
    $region44: #{tpu_custom_call.1} parent=1 // pred_region
      _
    $region45: #{tpu_custom_call.1} parent=1 // pred_fallthru
      _
    // Predicated region
    $region46: #{tpu_custom_call.1} parent=1 // pred_check
      _
    $region47: #{tpu_custom_call.1} parent=1 // pred_check_branch
      %330 = sbr.rel (0) target = $region49
    $region48: #{tpu_custom_call.1} parent=1 // pred_region
      _
    $region49: #{tpu_custom_call.1} parent=1 // pred_fallthru
      _
    %331 = vsyncpa [#allocation4], 1

</llo_original>
